<compile_context>
chip_gen: v5e
topology: v5e:2x2
jax: 0.10.0
libtpu: 0.0.40
codegen_flags: <defaults>
</compile_context>

<pallas_src>
import jax
import jax.numpy as jnp
from jax.experimental import pallas as pl
from jax.experimental.pallas import tpu as pltpu


def _projection_head_kernel(x_ref, w1_ref, shift_ref, w2_ref, b2_ref, o_ref):
    # x_ref:     (1, C, TM)  channel-major pixel tile (pixels on lanes)
    # w1_ref:    (C, C)      (W1 * bn_scale)^T   -- BN scale folded in
    # shift_ref: (C, 1)      (b1 - bn_mean)*bn_scale + bn_beta
    # w2_ref:    (P, C)      W2^T
    # b2_ref:    (P, 1)
    # o_ref:     (1, P, TM)
    x = x_ref[0].astype(jnp.float32)                                   # (C, TM)

    # Conv2d(C, C, 1) + folded BatchNorm + ReLU
    h = jnp.dot(w1_ref[...], x, preferred_element_type=jnp.float32)   # (C, TM)
    h = jnp.maximum(h + shift_ref[...], 0.0)

    # Conv2d(C, P, 1)
    y = jnp.dot(w2_ref[...], h, preferred_element_type=jnp.float32)   # (P, TM)
    y = y + b2_ref[...]

    # F.normalize(y, p=2, dim=channel): y / max(||y||_2, 1e-12)
    # rsqrt(max(sumsq, eps^2)) == 1 / max(||y||, eps); goes to the EUP.
    sumsq = jnp.sum(y * y, axis=0, keepdims=True)                      # (1, TM)
    inv = jax.lax.rsqrt(jnp.maximum(sumsq, 1e-24))
    o_ref[0] = (y * inv).astype(o_ref.dtype)


def projection_head_forward(x_nchw, params, *, tile_pixels=1024, bn_eps=1e-5):
    """x_nchw: [N, C, H, W] float32 -> [N, P, H, W] float32 (L2-normed over P)."""
    w1, b1 = params["w1"], params["b1"]
    gamma, beta = params["bn_gamma"], params["bn_beta"]
    mean, var = params["bn_mean"], params["bn_var"]
    w2, b2 = params["w2"], params["b2"]

    N, C, H, W = x_nchw.shape
    P = w2.shape[1]
    HW = H * W

    # Fold eval-mode BatchNorm into the first 1x1 conv.
    scale = gamma * jax.lax.rsqrt(var + bn_eps)              # (C,)
    w1_eff = (w1 * scale[None, :]).T                         # (C_out, C_in) = (C, C)
    shift = ((b1 - mean) * scale + beta).reshape(C, 1)       # (C, 1)
    w2_t = w2.T                                              # (P, C)
    b2_col = b2.reshape(P, 1)                                # (P, 1)

    # Channel-major pixel matrix: pure reshape, no transpose / extra HBM pass.
    x_rows = x_nchw.reshape(N, C, HW)

    # Pixel-tile size: multiple of 128, as large as requested but no larger
    # than the (128-rounded) spatial extent.
    tm = max(128, min(int(tile_pixels), pl.cdiv(HW, 128) * 128))
    tm = pl.cdiv(tm, 128) * 128
    HW_pad = pl.cdiv(HW, tm) * tm
    if HW_pad != HW:
        x_rows = jnp.pad(x_rows, ((0, 0), (0, 0), (0, HW_pad - HW)))

    grid = (N, HW_pad // tm)   # N >= 2 keeps both v7x TensorCores busy

    out = pl.pallas_call(
        _projection_head_kernel,
        out_shape=jax.ShapeDtypeStruct((N, P, HW_pad), x_nchw.dtype),
        grid_spec=pltpu.PrefetchScalarGridSpec(
            num_scalar_prefetch=0,
            grid=grid,
            in_specs=[
                pl.BlockSpec((1, C, tm), lambda n, j: (n, 0, j)),   # x tile
                pl.BlockSpec((C, C), lambda n, j: (0, 0)),          # folded W1^T
                pl.BlockSpec((C, 1), lambda n, j: (0, 0)),          # folded shift
                pl.BlockSpec((P, C), lambda n, j: (0, 0)),          # W2^T
                pl.BlockSpec((P, 1), lambda n, j: (0, 0)),          # b2
            ],
            out_specs=pl.BlockSpec((1, P, tm), lambda n, j: (n, 0, j)),
        ),
        compiler_params=pltpu.CompilerParams(
            dimension_semantics=("parallel", "parallel")),
    )(x_rows, w1_eff, shift, w2_t, b2_col)

    if HW_pad != HW:
        out = out[:, :, :HW]
    # (N, P, HW) -> (N, P, H, W): free reshape, already channel-major.
    return out.reshape(N, P, H, W)


def make_params(key, dim_in, proj_dim):
    """Deterministic parameter init matching the module's shapes.

    PyTorch Conv2d weight is (out, in, 1, 1); we store it as (in, out) so that
    conv1x1 == x_pixels @ W (the wrapper re-lays it out channel-major)."""
    k1, k2, k3, k4 = jax.random.split(key, 4)
    w1 = jax.random.normal(k1, (dim_in, dim_in), jnp.float32) * 0.05
    b1 = jax.random.normal(k2, (dim_in,), jnp.float32) * 0.01
    w2 = jax.random.normal(k3, (dim_in, proj_dim), jnp.float32) * 0.05
    b2 = jax.random.normal(k4, (proj_dim,), jnp.float32) * 0.01
    return dict(
        w1=w1, b1=b1,
        bn_gamma=jnp.ones((dim_in,), jnp.float32),
        bn_beta=jnp.zeros((dim_in,), jnp.float32),
        bn_mean=jnp.zeros((dim_in,), jnp.float32),
        bn_var=jnp.ones((dim_in,), jnp.float32),
        w2=w2, b2=b2,
    )


def _reference_forward(x_nchw, params):
    """Plain-JAX reference (row-major, exact sqrt/divide) for sanity checking."""
    N, C, H, W = x_nchw.shape
    x = jnp.transpose(x_nchw, (0, 2, 3, 1)).reshape(-1, C)
    h = x @ params["w1"] + params["b1"]
    scale = params["bn_gamma"] / jnp.sqrt(params["bn_var"] + 1e-5)
    shift = params["bn_beta"] - params["bn_mean"] * scale
    h = jnp.maximum(h * scale + shift, 0.0)
    y = h @ params["w2"] + params["b2"]
    y = y / jnp.maximum(
        jnp.sqrt(jnp.sum(y * y, axis=-1, keepdims=True)), 1e-12)
    P = y.shape[-1]
    return jnp.transpose(y.reshape(N, H, W, P), (0, 3, 1, 2))


if __name__ == "__main__":
    key = jax.random.PRNGKey(0)
    kx, kp = jax.random.split(key)

    N, C, H, W = 2, 32, 16, 16       # dim_in = 32
    proj_dim = 64

    x = jax.random.normal(kx, (N, C, H, W), jnp.float32)
    params = make_params(kp, C, proj_dim)

    out = projection_head_forward(x, params)
    out = jax.block_until_ready(out)

    ref = _reference_forward(x, params)
    assert out.shape == (N, proj_dim, H, W), out.shape
    assert jnp.allclose(out, ref, atol=1e-4, rtol=1e-4), \
        float(jnp.max(jnp.abs(out - ref)))

    print("KERNEL_OK")
</pallas_src>

<mosaic_0001>
module attributes {stable_mosaic.version = 11 : i64} {
  func.func @_projection_head_kernel(%arg0: i32, %arg1: i32, %arg2: memref<1x32x256xf32, #tpu.memory_space<vmem>>, %arg3: memref<32x32xf32, #tpu.memory_space<vmem>>, %arg4: memref<32x1xf32, #tpu.memory_space<vmem>>, %arg5: memref<64x32xf32, #tpu.memory_space<vmem>>, %arg6: memref<64x1xf32, #tpu.memory_space<vmem>>, %arg7: memref<1x64x256xf32, #tpu.memory_space<vmem>>) attributes {dimension_semantics = [#tpu.dimension_semantics<parallel>, #tpu.dimension_semantics<parallel>], iteration_bounds = array<i64: 2, 1>, scalar_prefetch = 0 : i64, scratch_operands = 0 : i64, tpu.core_type = #tpu.core_type<tc>, window_params = [{transform_indices = @transform_0, window_bounds = array<i64: 1, 32, 256>}, {pipeline_mode = #tpu.pipeline_mode<synchronous>, transform_indices = @transform_1, window_bounds = array<i64: 32, 32>}, {pipeline_mode = #tpu.pipeline_mode<synchronous>, transform_indices = @transform_2, window_bounds = array<i64: 32, 1>}, {pipeline_mode = #tpu.pipeline_mode<synchronous>, transform_indices = @transform_3, window_bounds = array<i64: 64, 32>}, {pipeline_mode = #tpu.pipeline_mode<synchronous>, transform_indices = @transform_4, window_bounds = array<i64: 64, 1>}, {transform_indices = @transform_5, window_bounds = array<i64: 1, 64, 256>}]} {
    %c0 = arith.constant 0 : index
    %c0_0 = arith.constant 0 : index
    %c0_1 = arith.constant 0 : index
    %0 = vector.load %arg2[%c0, %c0_0, %c0_1] : memref<1x32x256xf32, #tpu.memory_space<vmem>>, vector<1x32x256xf32>
    %1 = vector.shape_cast %0 : vector<1x32x256xf32> to vector<32x256xf32>
    %c0_2 = arith.constant 0 : index
    %c0_3 = arith.constant 0 : index
    %2 = vector.load %arg3[%c0_2, %c0_3] : memref<32x32xf32, #tpu.memory_space<vmem>>, vector<32x32xf32>
    %cst = arith.constant dense<0.000000e+00> : vector<32x256xf32>
    %3 = tpu.matmul %2, %1, %cst {dimension_numbers = #tpu.dot_dimension_numbers<[1], [0], [0], [1], [0, 0, 1, 1], [], []>} : vector<32x32xf32>, vector<32x256xf32>, vector<32x256xf32> -> vector<32x256xf32>
    %c0_4 = arith.constant 0 : index
    %c0_5 = arith.constant 0 : index
    %4 = vector.load %arg4[%c0_4, %c0_5] : memref<32x1xf32, #tpu.memory_space<vmem>>, vector<32x1xf32>
    %5 = vector.broadcast %4 : vector<32x1xf32> to vector<32x256xf32>
    %6 = arith.addf %3, %5 : vector<32x256xf32>
    %cst_6 = arith.constant 0.000000e+00 : f32
    %7 = vector.broadcast %cst_6 : f32 to vector<32x256xf32>
    %8 = arith.maximumf %6, %7 : vector<32x256xf32>
    %c0_7 = arith.constant 0 : index
    %c0_8 = arith.constant 0 : index
    %9 = vector.load %arg5[%c0_7, %c0_8] : memref<64x32xf32, #tpu.memory_space<vmem>>, vector<64x32xf32>
    %cst_9 = arith.constant dense<0.000000e+00> : vector<64x256xf32>
    %10 = tpu.matmul %9, %8, %cst_9 {dimension_numbers = #tpu.dot_dimension_numbers<[1], [0], [0], [1], [0, 0, 1, 1], [], []>} : vector<64x32xf32>, vector<32x256xf32>, vector<64x256xf32> -> vector<64x256xf32>
    %c0_10 = arith.constant 0 : index
    %c0_11 = arith.constant 0 : index
    %11 = vector.load %arg6[%c0_10, %c0_11] : memref<64x1xf32, #tpu.memory_space<vmem>>, vector<64x1xf32>
    %12 = vector.broadcast %11 : vector<64x1xf32> to vector<64x256xf32>
    %13 = arith.addf %10, %12 : vector<64x256xf32>
    %14 = arith.mulf %13, %13 : vector<64x256xf32>
    %cst_12 = arith.constant dense<0.000000e+00> : vector<256xf32>
    %15 = vector.multi_reduction <add>, %14, %cst_12 [0] : vector<64x256xf32> to vector<256xf32>
    %16 = vector.shape_cast %15 : vector<256xf32> to vector<1x256xf32>
    %cst_13 = arith.constant 1.000000e-24 : f32
    %17 = vector.broadcast %cst_13 : f32 to vector<1x256xf32>
    %18 = arith.maximumf %16, %17 : vector<1x256xf32>
    %19 = math.rsqrt %18 : vector<1x256xf32>
    %20 = vector.broadcast %19 : vector<1x256xf32> to vector<64x256xf32>
    %21 = arith.mulf %13, %20 : vector<64x256xf32>
    %c0_14 = arith.constant 0 : index
    %c0_15 = arith.constant 0 : index
    %c0_16 = arith.constant 0 : index
    %22 = vector.load %arg7[%c0_14, %c0_15, %c0_16] : memref<1x64x256xf32, #tpu.memory_space<vmem>>, vector<1x64x256xf32>
    %23 = vector.shape_cast %22 : vector<1x64x256xf32> to vector<64x256xf32>
    %24 = vector.shape_cast %21 : vector<64x256xf32> to vector<1x64x256xf32>
    tpu.vector_store %arg7[%c0_14, %c0_15, %c0_16], %24 {strides = array<i32>} : memref<1x64x256xf32, #tpu.memory_space<vmem>>, vector<1x64x256xf32>,
    return
  }
  func.func @transform_0(%arg0: i32, %arg1: i32) -> (i32, i32, i32) {
    %c0_i32 = arith.constant 0 : i32
    %c0_i32_0 = arith.constant 0 : i32
    return %arg0, %c0_i32, %arg1 : i32, i32, i32
  }
  func.func @transform_1(%arg0: i32, %arg1: i32) -> (i32, i32) {
    %c0_i32 = arith.constant 0 : i32
    %c0_i32_0 = arith.constant 0 : i32
    %c0_i32_1 = arith.constant 0 : i32
    return %c0_i32, %c0_i32_0 : i32, i32
  }
  func.func @transform_2(%arg0: i32, %arg1: i32) -> (i32, i32) {
    %c0_i32 = arith.constant 0 : i32
    %c0_i32_0 = arith.constant 0 : i32
    %c0_i32_1 = arith.constant 0 : i32
    return %c0_i32, %c0_i32_0 : i32, i32
  }
  func.func @transform_3(%arg0: i32, %arg1: i32) -> (i32, i32) {
    %c0_i32 = arith.constant 0 : i32
    %c0_i32_0 = arith.constant 0 : i32
    %c0_i32_1 = arith.constant 0 : i32
    return %c0_i32, %c0_i32_0 : i32, i32
  }
  func.func @transform_4(%arg0: i32, %arg1: i32) -> (i32, i32) {
    %c0_i32 = arith.constant 0 : i32
    %c0_i32_0 = arith.constant 0 : i32
    %c0_i32_1 = arith.constant 0 : i32
    return %c0_i32, %c0_i32_0 : i32, i32
  }
  func.func @transform_5(%arg0: i32, %arg1: i32) -> (i32, i32, i32) {
    %c0_i32 = arith.constant 0 : i32
    %c0_i32_0 = arith.constant 0 : i32
    return %arg0, %c0_i32, %arg1 : i32, i32, i32
  }
}

</mosaic_0001>

<llo_original>
// kernel: tpu_custom_call.1
$region0: #{tpu_custom_call.1}
  #allocation0 [shape = 'u32[]', space=smem, size = 0x4, offset = 0x4, fixed_abs, tag = 'smem constant byte address 0x4 - core index']
  #allocation1 [shape = 'u32[72,128]{1,0:T(1,128)}', space=vmem, size = 0x9000, scoped, tag = 'internal scratch']
  %s0 = inlined_call_operand.vmem [shape: f32[2,32,256], index: 0, kind: input, shape index: {}]
  %s1 = inlined_call_operand.vmem [shape: f32[32,32], index: 1, kind: input, shape index: {}]
  %s2 = inlined_call_operand.vmem [shape: f32[32,1], index: 2, kind: input, shape index: {}]
  %s3 = inlined_call_operand.vmem [shape: f32[64,32], index: 3, kind: input, shape index: {}]
  %s4 = inlined_call_operand.vmem [shape: f32[64,1], index: 4, kind: input, shape index: {}]
  %s5 = inlined_call_operand.hbm [shape: f32[2,64,256], index: 5, kind: output, shape index: {}]
  %s6 = sld [smem:[#allocation0]]
  $region53: #{tpu_custom_call.1} parent=0
    _
  %s8 = ssub.s32 1, %s6
  %s9 = scalar_select 0, %s8, %s6
  $region1: #{tpu_custom_call.1} parent=0
    #allocation2 [shape = 'u8[131072]{0}', space=vmem, size = 0x20000, scoped, tag = 'output window, operand 0']
    #allocation3 [shape = 's32[2]{0}', space=sflag, size = 0x8, scoped, tag = 'scoped memory for tpu_custom_call.1']
    %10 = vsyncpa [#allocation3], 0
    %s11 = scalar_lea.sflag [#allocation3], 1
    %12 = vsyncpa %s11, 0
    loop: start=0, step=1, limit=4
    $region2: #{tpu_custom_call.1} parent=1 // loop_pre_header
      _
    $region3: #{tpu_custom_call.1} parent=1 // loop_header
      %s14 = sphi 0, %s18
      %p15 = scmp.ge.s32.totalorder %s14, 4
      %s21 = sphi 0, %s33
      %s22 = sphi 0, %s29
      %s23 = sphi 0, %s21
      %s24 = sphi 0, %s22
      %s25 = sphi 0, %s23
      %s26 = sphi 0, %s24
      %s38 = sphi 0, %s40
      %s41 = sphi 0, %s38
      %s42 = sphi 0, %s41
      %s58 = sphi 0, %s42
      %s62 = sphi 0, %s62
      %s64 = sphi 0, %s62
      %s65 = sphi 0, %s64
      %s79 = sphi 0, %s65
      %s83 = sphi 0, %s83
      %s85 = sphi 0, %s83
      %s86 = sphi 0, %s85
      %s100 = sphi 0, %s86
      %s104 = sphi 0, %s104
      %s106 = sphi 0, %s104
      %s107 = sphi 0, %s106
      %s121 = sphi 0, %s107
      %s125 = sphi 0, %s125
      %s127 = sphi 0, %s125
      %s128 = sphi 0, %s127
      %s142 = sphi 0, %s128
      %s150 = sphi 0, %s152
      %s153 = sphi 0, %s150
      %s154 = sphi 0, %s153
      %s170 = sphi 0, %s154
    $region4: #{tpu_custom_call.1} parent=1 // loop_header_branch
      %17 = sbr.rel (%p15) target = $region8
    $region5: #{tpu_custom_call.1} parent=1 // loop_body
      %s19 = ssub.s32 %s14, 1
      %s20 = ssub.s32 %s14, 2
      %s27 = sadd.s32 1, %s22
      %p28 = scmp.ge.s32.totalorder %s27, 1
      %s29 = scalar_select %p28, 0, %s27
      %s30 = sadd.s32 1, %s21
      %s31 = scalar_select %p28, %s30, %s21
      %p32 = scmp.ge.s32.totalorder %s31, 2
      %s33 = scalar_select %p32, 0, %s31
      %s34 = ssub.s32 %s21, %s33
      %s35 = ssub.s32 %s22, %s29
      %s36 = sor.u32 %s34, %s35
      %p37 = scmp.eq.s32.totalorder %s36, 0
      %s39 = sadd.s32 %s38, 1
      %s40 = scalar_select %p37, %s38, %s39
      %p43 = pneg %p37
      %p44 = scmp.eq.s32.totalorder %s14, 1
      %p45 = por %p43, %p44
      %p46 = scmp.ne.s32.totalorder %s38, %s41
      %p47 = scmp.eq.s32.totalorder %s14, 0
      %p48 = por %p46, %p47
      %p49 = scmp.ne.s32.totalorder %s38, %s41
      %p50 = scmp.eq.s32.totalorder %s19, 1
      %p51 = por %p49, %p50
      %p52 = scmp.ne.s32.totalorder %s41, %s42
      %p53 = scmp.eq.s32.totalorder %s19, 0
      %p54 = por %p52, %p53
      %p55 = scmp.ne.s32.totalorder %s41, %s42
      %p56 = scmp.eq.s32.totalorder %s20, 1
      %p57 = por %p55, %p56
      %p59 = scmp.ne.s32.totalorder %s42, %s58
      %p60 = scmp.eq.s32.totalorder %s20, 0
      %p61 = por %p59, %p60
      %s63 = sadd.s32 %s62, 1
      %p66 = scmp.eq.s32.totalorder %s14, 1
      %p67 = scmp.ne.s32.totalorder %s62, %s64
      %p68 = scmp.eq.s32.totalorder %s14, 0
      %p69 = por %p67, %p68
      %p70 = scmp.ne.s32.totalorder %s62, %s64
      %p71 = scmp.eq.s32.totalorder %s19, 1
      %p72 = por %p70, %p71
      %p73 = scmp.ne.s32.totalorder %s64, %s65
      %p74 = scmp.eq.s32.totalorder %s19, 0
      %p75 = por %p73, %p74
      %p76 = scmp.ne.s32.totalorder %s64, %s65
      %p77 = scmp.eq.s32.totalorder %s20, 1
      %p78 = por %p76, %p77
      %p80 = scmp.ne.s32.totalorder %s65, %s79
      %p81 = scmp.eq.s32.totalorder %s20, 0
      %p82 = por %p80, %p81
      %s84 = sadd.s32 %s83, 1
      %p87 = scmp.eq.s32.totalorder %s14, 1
      %p88 = scmp.ne.s32.totalorder %s83, %s85
      %p89 = scmp.eq.s32.totalorder %s14, 0
      %p90 = por %p88, %p89
      %p91 = scmp.ne.s32.totalorder %s83, %s85
      %p92 = scmp.eq.s32.totalorder %s19, 1
      %p93 = por %p91, %p92
      %p94 = scmp.ne.s32.totalorder %s85, %s86
      %p95 = scmp.eq.s32.totalorder %s19, 0
      %p96 = por %p94, %p95
      %p97 = scmp.ne.s32.totalorder %s85, %s86
      %p98 = scmp.eq.s32.totalorder %s20, 1
      %p99 = por %p97, %p98
      %p101 = scmp.ne.s32.totalorder %s86, %s100
      %p102 = scmp.eq.s32.totalorder %s20, 0
      %p103 = por %p101, %p102
      %s105 = sadd.s32 %s104, 1
      %p108 = scmp.eq.s32.totalorder %s14, 1
      %p109 = scmp.ne.s32.totalorder %s104, %s106
      %p110 = scmp.eq.s32.totalorder %s14, 0
      %p111 = por %p109, %p110
      %p112 = scmp.ne.s32.totalorder %s104, %s106
      %p113 = scmp.eq.s32.totalorder %s19, 1
      %p114 = por %p112, %p113
      %p115 = scmp.ne.s32.totalorder %s106, %s107
      %p116 = scmp.eq.s32.totalorder %s19, 0
      %p117 = por %p115, %p116
      %p118 = scmp.ne.s32.totalorder %s106, %s107
      %p119 = scmp.eq.s32.totalorder %s20, 1
      %p120 = por %p118, %p119
      %p122 = scmp.ne.s32.totalorder %s107, %s121
      %p123 = scmp.eq.s32.totalorder %s20, 0
      %p124 = por %p122, %p123
      %s126 = sadd.s32 %s125, 1
      %p129 = scmp.eq.s32.totalorder %s14, 1
      %p130 = scmp.ne.s32.totalorder %s125, %s127
      %p131 = scmp.eq.s32.totalorder %s14, 0
      %p132 = por %p130, %p131
      %p133 = scmp.ne.s32.totalorder %s125, %s127
      %p134 = scmp.eq.s32.totalorder %s19, 1
      %p135 = por %p133, %p134
      %p136 = scmp.ne.s32.totalorder %s127, %s128
      %p137 = scmp.eq.s32.totalorder %s19, 0
      %p138 = por %p136, %p137
      %p139 = scmp.ne.s32.totalorder %s127, %s128
      %p140 = scmp.eq.s32.totalorder %s20, 1
      %p141 = por %p139, %p140
      %p143 = scmp.ne.s32.totalorder %s128, %s142
      %p144 = scmp.eq.s32.totalorder %s20, 0
      %p145 = por %p143, %p144
      %s146 = ssub.s32 %s21, %s33
      %s147 = ssub.s32 %s22, %s29
      %s148 = sor.u32 %s146, %s147
      %p149 = scmp.eq.s32.totalorder %s148, 0
      %s151 = sadd.s32 %s150, 1
      %s152 = scalar_select %p149, %s150, %s151
      %p155 = pneg %p149
      %p156 = scmp.eq.s32.totalorder %s14, 1
      %p157 = por %p155, %p156
      %p158 = scmp.ne.s32.totalorder %s150, %s153
      %p159 = scmp.eq.s32.totalorder %s14, 0
      %p160 = por %p158, %p159
      %p161 = scmp.ne.s32.totalorder %s150, %s153
      %p162 = scmp.eq.s32.totalorder %s19, 1
      %p163 = por %p161, %p162
      %p164 = scmp.ne.s32.totalorder %s153, %s154
      %p165 = scmp.eq.s32.totalorder %s19, 0
      %p166 = por %p164, %p165
      %p167 = scmp.ne.s32.totalorder %s153, %s154
      %p168 = scmp.eq.s32.totalorder %s20, 1
      %p169 = por %p167, %p168
      %p171 = scmp.ne.s32.totalorder %s154, %s170
      %p172 = scmp.eq.s32.totalorder %s20, 0
      %p173 = por %p171, %p172
      %p174 = scmp.le.s32.totalorder 1, %s14
      %p175 = scmp.lt.s32.totalorder %s14, 3
      %p176 = pnand %p174, %p175
      %p177 = pneg %p176
      // Predicated region
      $region9: #{tpu_custom_call.1} parent=5 // pred_check
        _
      $region10: #{tpu_custom_call.1} parent=5 // pred_check_branch
        %179 = sbr.rel (%p176) target = $region12
      $region11: #{tpu_custom_call.1} parent=5 // pred_region
        %s180 = ssub.s32 %s14, 1
        // Predicated region
        $region13: #{tpu_custom_call.1} parent=11 // pred_check
          %p181 = pneg %p75
        $region14: #{tpu_custom_call.1} parent=11 // pred_check_branch
          %183 = sbr.rel (%p181) target = $region16
        $region15: #{tpu_custom_call.1} parent=11 // pred_region
          _
        $region16: #{tpu_custom_call.1} parent=11 // pred_fallthru
          _
        // Predicated region
        $region17: #{tpu_custom_call.1} parent=11 // pred_check
          %p184 = pneg %p96
        $region18: #{tpu_custom_call.1} parent=11 // pred_check_branch
          %186 = sbr.rel (%p184) target = $region20
        $region19: #{tpu_custom_call.1} parent=11 // pred_region
          _
        $region20: #{tpu_custom_call.1} parent=11 // pred_fallthru
          _
        // Predicated region
        $region21: #{tpu_custom_call.1} parent=11 // pred_check
          %p187 = pneg %p117
        $region22: #{tpu_custom_call.1} parent=11 // pred_check_branch
          %189 = sbr.rel (%p187) target = $region24
        $region23: #{tpu_custom_call.1} parent=11 // pred_region
          _
        $region24: #{tpu_custom_call.1} parent=11 // pred_fallthru
          _
        // Predicated region
        $region25: #{tpu_custom_call.1} parent=11 // pred_check
          %p190 = pneg %p138
        $region26: #{tpu_custom_call.1} parent=11 // pred_check_branch
          %192 = sbr.rel (%p190) target = $region28
        $region27: #{tpu_custom_call.1} parent=11 // pred_region
          _
        $region28: #{tpu_custom_call.1} parent=11 // pred_fallthru
          _
      $region12: #{tpu_custom_call.1} parent=5 // pred_fallthru
        _
      %p193 = scmp.lt.s32.totalorder %s14, 2
      // Predicated region
      $region29: #{tpu_custom_call.1} parent=5 // pred_check
        %p194 = pneg %p193
      $region30: #{tpu_custom_call.1} parent=5 // pred_check_branch
        %196 = sbr.rel (%p194) target = $region32
      $region31: #{tpu_custom_call.1} parent=5 // pred_region
        // Predicated region
        $region33: #{tpu_custom_call.1} parent=31 // pred_check
          %p197 = pneg %p48
        $region34: #{tpu_custom_call.1} parent=31 // pred_check_branch
          %199 = sbr.rel (%p197) target = $region36
        $region35: #{tpu_custom_call.1} parent=31 // pred_region
          %s200 = smul.u32 2, %s22
          %p201 = scmp.lt.s32.totalorder %s21, 1
          %s202 = scalar_select %p201, %s21, 1
          %p203 = scmp.lt.s32.totalorder %s200, 1
          %s204 = scalar_select %p203, %s200, 1
          %s205 = smul.addr %s202, 8
          %s206 = sadd.s32 %s204, %s205
          %s207 = smul.addr %s206, 8
          %s208 = scalar_lea.vmem %s0, %s207
          %s209 = smul.u32 2, %s22
        $region36: #{tpu_custom_call.1} parent=31 // pred_fallthru
          _
      $region32: #{tpu_custom_call.1} parent=5 // pred_fallthru
        _
      %p210 = scmp.le.s32.totalorder 1, %s14
      %p211 = scmp.lt.s32.totalorder %s14, 3
      %p212 = pnand %p210, %p211
      %p213 = pneg %p212
      // Predicated region
      $region37: #{tpu_custom_call.1} parent=5 // pred_check
        _
      $region38: #{tpu_custom_call.1} parent=5 // pred_check_branch
        %215 = sbr.rel (%p212) target = $region40
      $region39: #{tpu_custom_call.1} parent=5 // pred_region
        %s216 = ssub.s32 %s14, 1
        %s217 = smul.u32 2, %s24
        %p218 = scmp.lt.s32.totalorder %s23, 1
        %s219 = scalar_select %p218, %s23, 1
        %p220 = scmp.lt.s32.totalorder %s217, 1
        %s221 = scalar_select %p220, %s217, 1
        %s222 = smul.addr %s219, 8
        %s223 = sadd.s32 %s221, %s222
        %s224 = smul.addr %s223, 8
        %s225 = scalar_lea.vmem %s0, %s224
        %p226 = pneg %p54
        %p227 = pneg %p51
        %p228 = pneg %p75
        %p229 = pneg %p72
        %p230 = pneg %p96
        %p231 = pneg %p93
        %p232 = pneg %p117
        %p233 = pneg %p114
        %p234 = pneg %p138
        %p235 = pneg %p135
        %p236 = pneg %p166
        %p237 = pneg %p163
        %s238 = sand.u32 %s153, 1
        %s239 = scalar_lea.sflag [#allocation3], %s238
        %s240 = sand.u32 %s153, 1
        %s241 = smul.addr %s240, 128
        %s242 = scalar_lea.vmem [#allocation2], %s241
        %s243 = smul.u32 2, %s24
        %p244 = scmp.lt.s32.totalorder %s23, 1
        %s245 = scalar_select %p244, %s23, 1
        %p246 = scmp.lt.s32.totalorder %s243, 1
        %s247 = scalar_select %p246, %s243, 1
        %s248 = smul.addr %s245, 8
        %s249 = sadd.s32 %s247, %s248
        %s250 = smul.addr %s249, 8
        %s251 = scalar_lea.vmem %s0, %s250
        %s252 = smul.u32 2, %s24
        %s253 = smul.u32 2, %s24
        %v254 = vld [vmem:[%s251] sm:$0xff]
        %v255 = vld [vmem:[%s251 + $0x8] sm:$0xff]
        %v256 = vld [vmem:[%s251 + $0x10] sm:$0xff]
        %v257 = vld [vmem:[%s251 + $0x18] sm:$0xff]
        %v258 = vld [vmem:[%s251 + $0x20] sm:$0xff]
        %v259 = vld [vmem:[%s251 + $0x28] sm:$0xff]
        %v260 = vld [vmem:[%s251 + $0x30] sm:$0xff]
        %v261 = vld [vmem:[%s251 + $0x38] sm:$0xff]
        %v262 = vld [vmem:[%s1] sm:$0xff]
        %v263 = vld [vmem:[%s1 + $0x8] sm:$0xff]
        %v264 = vld [vmem:[%s1 + $0x10] sm:$0xff]
        %v265 = vld [vmem:[%s1 + $0x18] sm:$0xff]
        %v266 = vld [vmem:[%s2] sm:$0xff]
        %v267 = vld [vmem:[%s2 + $0x8] sm:$0xff]
        %v268 = vld [vmem:[%s2 + $0x10] sm:$0xff]
        %v269 = vld [vmem:[%s2 + $0x18] sm:$0xff]
        %271 = vset.pattern.permute.xlu0 0
        %272 = vperm.xlu0 %271, %v266
        %v273 = vpop.permute.xlu0 %272
        %276 = vset.pattern.permute.xlu0 0
        %277 = vperm.xlu0 %276, %v267
        %v278 = vpop.permute.xlu0 %277
        %281 = vset.pattern.permute.xlu0 0
        %282 = vperm.xlu0 %281, %v268
        %v283 = vpop.permute.xlu0 %282
        %286 = vset.pattern.permute.xlu0 0
        %287 = vperm.xlu0 %286, %v269
        %v288 = vpop.permute.xlu0 %287
        %vm290 = vcmask 261120
        %v292 = vsel %vm290, %v262, 0
        %v295 = vsel %vm290, %v263, 0
        %v298 = vsel %vm290, %v264, 0
        %v301 = vsel %vm290, %v265, 0
        %303 = vmatpush.msra.mxu0 0.0
        %304 = vmatpush.msra.mxu0 0.0
        %305 = vmatpush.msra.mxu0 0.0
        %306 = vmatpush.msra.mxu0 0.0
        %307 = vmatpush.msra.mxu0 0.0
        %308 = vmatpush.msra.mxu0 0.0
        %309 = vmatpush.msra.mxu0 0.0
        %310 = vmatpush.msra.mxu0 0.0
        %311 = vmatpush.msra.mxu0 0.0
        %312 = vmatpush.msra.mxu0 0.0
        %313 = vmatpush.msra.mxu0 0.0
        %314 = vmatpush.msra.mxu0 0.0
        %315 = vmatpush.msra.mxu0 %v260
        %316 = vmatpush.msra.mxu0 %v258
        %317 = vmatpush.msra.mxu0 %v256
        %318 = vmatpush.msra.mxu0 %v254
        %319 = vmatmul.f32.gmra.mxu0 %v292
        %v320 = vpop.f32.mrf.mxu0
        %v321 = vadd.f32 %v273, %v320
        %322 = vmatmul.f32.gmra.mxu0 %v295
        %v323 = vpop.f32.mrf.mxu0
        %v324 = vadd.f32 %v278, %v323
        %325 = vmatmul.f32.gmra.mxu0 %v298
        %v326 = vpop.f32.mrf.mxu0
        %v327 = vadd.f32 %v283, %v326
        %328 = vmatmul.f32.gmra.mxu0 %v301
        %v329 = vpop.f32.mrf.mxu0
        %v330 = vadd.f32 %v288, %v329
        %331 = vdwg.mxu0
        %332 = vmatpush.msra.mxu0 0.0
        %333 = vmatpush.msra.mxu0 0.0
        %334 = vmatpush.msra.mxu0 0.0
        %335 = vmatpush.msra.mxu0 0.0
        %336 = vmatpush.msra.mxu0 0.0
        %337 = vmatpush.msra.mxu0 0.0
        %338 = vmatpush.msra.mxu0 0.0
        %339 = vmatpush.msra.mxu0 0.0
        %340 = vmatpush.msra.mxu0 0.0
        %341 = vmatpush.msra.mxu0 0.0
        %342 = vmatpush.msra.mxu0 0.0
        %343 = vmatpush.msra.mxu0 0.0
        %344 = vmatpush.msra.mxu0 %v261
        %345 = vmatpush.msra.mxu0 %v259
        %346 = vmatpush.msra.mxu0 %v257
        %347 = vmatpush.msra.mxu0 %v255
        %348 = vmatmul.f32.gmra.mxu0 %v292
        %v349 = vpop.f32.mrf.mxu0
        %v350 = vadd.f32 %v273, %v349
        %351 = vmatmul.f32.gmra.mxu0 %v295
        %v352 = vpop.f32.mrf.mxu0
        %v353 = vadd.f32 %v278, %v352
        %354 = vmatmul.f32.gmra.mxu0 %v298
        %v355 = vpop.f32.mrf.mxu0
        %v356 = vadd.f32 %v283, %v355
        %357 = vmatmul.f32.gmra.mxu0 %v301
        %v358 = vpop.f32.mrf.mxu0
        %v359 = vadd.f32 %v288, %v358
        %360 = vdwg.mxu0
        %v361 = vmax.f32 %v321, 0.0
        %v362 = vmax.f32 %v350, 0.0
        %v363 = vmax.f32 %v324, 0.0
        %v364 = vmax.f32 %v353, 0.0
        %v365 = vmax.f32 %v327, 0.0
        %v366 = vmax.f32 %v356, 0.0
        %v367 = vmax.f32 %v330, 0.0
        %v368 = vmax.f32 %v359, 0.0
        %v369 = vld [vmem:[%s3] sm:$0xff]
        %v370 = vld [vmem:[%s3 + $0x8] sm:$0xff]
        %v371 = vld [vmem:[%s3 + $0x10] sm:$0xff]
        %v372 = vld [vmem:[%s3 + $0x18] sm:$0xff]
        %v373 = vld [vmem:[%s3 + $0x20] sm:$0xff]
        %v374 = vld [vmem:[%s3 + $0x28] sm:$0xff]
        %v375 = vld [vmem:[%s3 + $0x30] sm:$0xff]
        %v376 = vld [vmem:[%s3 + $0x38] sm:$0xff]
        %v377 = vld [vmem:[%s4] sm:$0xff]
        %v378 = vld [vmem:[%s4 + $0x8] sm:$0xff]
        %v379 = vld [vmem:[%s4 + $0x10] sm:$0xff]
        %v380 = vld [vmem:[%s4 + $0x18] sm:$0xff]
        %v381 = vld [vmem:[%s4 + $0x20] sm:$0xff]
        %v382 = vld [vmem:[%s4 + $0x28] sm:$0xff]
        %v383 = vld [vmem:[%s4 + $0x30] sm:$0xff]
        %v384 = vld [vmem:[%s4 + $0x38] sm:$0xff]
        %386 = vset.pattern.permute.xlu0 0
        %387 = vperm.xlu0 %386, %v377
        %v388 = vpop.permute.xlu0 %387
        %391 = vset.pattern.permute.xlu0 0
        %392 = vperm.xlu0 %391, %v378
        %v393 = vpop.permute.xlu0 %392
        %396 = vset.pattern.permute.xlu0 0
        %397 = vperm.xlu0 %396, %v379
        %v398 = vpop.permute.xlu0 %397
        %401 = vset.pattern.permute.xlu0 0
        %402 = vperm.xlu0 %401, %v380
        %v403 = vpop.permute.xlu0 %402
        %406 = vset.pattern.permute.xlu0 0
        %407 = vperm.xlu0 %406, %v381
        %v408 = vpop.permute.xlu0 %407
        %411 = vset.pattern.permute.xlu0 0
        %412 = vperm.xlu0 %411, %v382
        %v413 = vpop.permute.xlu0 %412
        %416 = vset.pattern.permute.xlu0 0
        %417 = vperm.xlu0 %416, %v383
        %v418 = vpop.permute.xlu0 %417
        %421 = vset.pattern.permute.xlu0 0
        %422 = vperm.xlu0 %421, %v384
        %v423 = vpop.permute.xlu0 %422
        %v426 = vsel %vm290, %v369, 0
        %v429 = vsel %vm290, %v370, 0
        %v432 = vsel %vm290, %v371, 0
        %v435 = vsel %vm290, %v372, 0
        %v438 = vsel %vm290, %v373, 0
        %v441 = vsel %vm290, %v374, 0
        %v444 = vsel %vm290, %v375, 0
        %v447 = vsel %vm290, %v376, 0
        %449 = vmatpush.msra.mxu0 0.0
        %450 = vmatpush.msra.mxu0 0.0
        %451 = vmatpush.msra.mxu0 0.0
        %452 = vmatpush.msra.mxu0 0.0
        %453 = vmatpush.msra.mxu0 0.0
        %454 = vmatpush.msra.mxu0 0.0
        %455 = vmatpush.msra.mxu0 0.0
        %456 = vmatpush.msra.mxu0 0.0
        %457 = vmatpush.msra.mxu0 0.0
        %458 = vmatpush.msra.mxu0 0.0
        %459 = vmatpush.msra.mxu0 0.0
        %460 = vmatpush.msra.mxu0 0.0
        %461 = vmatpush.msra.mxu0 %v367
        %462 = vmatpush.msra.mxu0 %v365
        %463 = vmatpush.msra.mxu0 %v363
        %464 = vmatpush.msra.mxu0 %v361
        %465 = vmatmul.f32.gmra.mxu0 %v426
        %v466 = vpop.f32.mrf.mxu0
        %v467 = vadd.f32 %v388, %v466
        %468 = vmatmul.f32.gmra.mxu0 %v429
        %v469 = vpop.f32.mrf.mxu0
        %v470 = vadd.f32 %v393, %v469
        %471 = vmatmul.f32.gmra.mxu0 %v432
        %v472 = vpop.f32.mrf.mxu0
        %v473 = vadd.f32 %v398, %v472
        %474 = vmatmul.f32.gmra.mxu0 %v435
        %v475 = vpop.f32.mrf.mxu0
        %v476 = vadd.f32 %v403, %v475
        %477 = vmatmul.f32.gmra.mxu0 %v438
        %v478 = vpop.f32.mrf.mxu0
        %v479 = vadd.f32 %v408, %v478
        %480 = vmatmul.f32.gmra.mxu0 %v441
        %v481 = vpop.f32.mrf.mxu0
        %v482 = vadd.f32 %v413, %v481
        %483 = vmatmul.f32.gmra.mxu0 %v444
        %v484 = vpop.f32.mrf.mxu0
        %v485 = vadd.f32 %v418, %v484
        %486 = vmatmul.f32.gmra.mxu0 %v447
        %v487 = vpop.f32.mrf.mxu0
        %v488 = vadd.f32 %v423, %v487
        %489 = vdwg.mxu0
        %490 = vmatpush.msra.mxu0 0.0
        %491 = vmatpush.msra.mxu0 0.0
        %492 = vmatpush.msra.mxu0 0.0
        %493 = vmatpush.msra.mxu0 0.0
        %494 = vmatpush.msra.mxu0 0.0
        %495 = vmatpush.msra.mxu0 0.0
        %496 = vmatpush.msra.mxu0 0.0
        %497 = vmatpush.msra.mxu0 0.0
        %498 = vmatpush.msra.mxu0 0.0
        %499 = vmatpush.msra.mxu0 0.0
        %500 = vmatpush.msra.mxu0 0.0
        %501 = vmatpush.msra.mxu0 0.0
        %502 = vmatpush.msra.mxu0 %v368
        %503 = vmatpush.msra.mxu0 %v366
        %504 = vmatpush.msra.mxu0 %v364
        %505 = vmatpush.msra.mxu0 %v362
        %506 = vmatmul.f32.gmra.mxu0 %v426
        %v507 = vpop.f32.mrf.mxu0
        %v508 = vadd.f32 %v388, %v507
        %509 = vmatmul.f32.gmra.mxu0 %v429
        %v510 = vpop.f32.mrf.mxu0
        %v511 = vadd.f32 %v393, %v510
        %512 = vmatmul.f32.gmra.mxu0 %v432
        %v513 = vpop.f32.mrf.mxu0
        %v514 = vadd.f32 %v398, %v513
        %515 = vmatmul.f32.gmra.mxu0 %v435
        %v516 = vpop.f32.mrf.mxu0
        %v517 = vadd.f32 %v403, %v516
        %518 = vmatmul.f32.gmra.mxu0 %v438
        %v519 = vpop.f32.mrf.mxu0
        %v520 = vadd.f32 %v408, %v519
        %521 = vmatmul.f32.gmra.mxu0 %v441
        %v522 = vpop.f32.mrf.mxu0
        %v523 = vadd.f32 %v413, %v522
        %524 = vmatmul.f32.gmra.mxu0 %v444
        %v525 = vpop.f32.mrf.mxu0
        %v526 = vadd.f32 %v418, %v525
        %527 = vmatmul.f32.gmra.mxu0 %v447
        %v528 = vpop.f32.mrf.mxu0
        %v529 = vadd.f32 %v423, %v528
        %530 = vdwg.mxu0
        %v531 = vmul.f32 %v467, %v467
        %v532 = vmul.f32 %v508, %v508
        %v533 = vmul.f32 %v470, %v470
        %v534 = vmul.f32 %v511, %v511
        %v535 = vmul.f32 %v473, %v473
        %v536 = vmul.f32 %v514, %v514
        %v537 = vmul.f32 %v476, %v476
        %v538 = vmul.f32 %v517, %v517
        %v539 = vmul.f32 %v479, %v479
        %v540 = vmul.f32 %v520, %v520
        %v541 = vmul.f32 %v482, %v482
        %v542 = vmul.f32 %v523, %v523
        %v543 = vmul.f32 %v485, %v485
        %v544 = vmul.f32 %v526, %v526
        %v545 = vmul.f32 %v488, %v488
        %v546 = vmul.f32 %v529, %v529
        %v547 = vadd.f32 %v531, %v533
        %v548 = vadd.f32 %v547, %v535
        %v549 = vadd.f32 %v548, %v537
        %v550 = vadd.f32 %v549, %v539
        %v551 = vadd.f32 %v550, %v541
        %v552 = vadd.f32 %v551, %v543
        %v553 = vadd.f32 %v552, %v545
        %v554 = vrot.slane %v553, 4
        %v555 = vadd.f32 %v553, %v554
        %v556 = vrot.slane %v555, 2
        %v557 = vadd.f32 %v555, %v556
        %v558 = vrot.slane %v557, 1
        %v559 = vadd.f32 %v557, %v558
        %v560 = vadd.f32 %v532, %v534
        %v561 = vadd.f32 %v560, %v536
        %v562 = vadd.f32 %v561, %v538
        %v563 = vadd.f32 %v562, %v540
        %v564 = vadd.f32 %v563, %v542
        %v565 = vadd.f32 %v564, %v544
        %v566 = vadd.f32 %v565, %v546
        %v567 = vrot.slane %v566, 4
        %v568 = vadd.f32 %v566, %v567
        %v569 = vrot.slane %v568, 2
        %v570 = vadd.f32 %v568, %v569
        %v571 = vrot.slane %v570, 1
        %v572 = vadd.f32 %v570, %v571
        %v573 = vmax.f32 %v559, 1e-24
        %v574 = vmax.f32 %v572, 1e-24
        %v575 = vrsqrt.pop %v573
        %v576 = vmul.f32 %v575, %v573
        %v577 = vmul.f32 %v576, %v575
        %v578 = vmul.f32 0.5, %v577
        %v579 = vsub.f32 1.5, %v578
        %v580 = vmul.f32 %v575, %v579
        %vm581 = vweird.f32 %v573
        %vm582 = vweird.f32 %v575
        %vm583 = vmor %vm581, %vm582
        %v584 = vsel %vm583, %v575, %v580
        %v585 = vrsqrt.pop %v574
        %v586 = vmul.f32 %v585, %v574
        %v587 = vmul.f32 %v586, %v585
        %v588 = vmul.f32 0.5, %v587
        %v589 = vsub.f32 1.5, %v588
        %v590 = vmul.f32 %v585, %v589
        %vm591 = vweird.f32 %v574
        %vm592 = vweird.f32 %v585
        %vm593 = vmor %vm591, %vm592
        %v594 = vsel %vm593, %v585, %v590
        %v595 = vmul.f32 %v467, %v584
        %v596 = vmul.f32 %v508, %v594
        %v597 = vmul.f32 %v470, %v584
        %v598 = vmul.f32 %v511, %v594
        %v599 = vmul.f32 %v473, %v584
        %v600 = vmul.f32 %v514, %v594
        %v601 = vmul.f32 %v476, %v584
        %v602 = vmul.f32 %v517, %v594
        %v603 = vmul.f32 %v479, %v584
        %v604 = vmul.f32 %v520, %v594
        %v605 = vmul.f32 %v482, %v584
        %v606 = vmul.f32 %v523, %v594
        %v607 = vmul.f32 %v485, %v584
        %v608 = vmul.f32 %v526, %v594
        %v609 = vmul.f32 %v488, %v584
        %v610 = vmul.f32 %v529, %v594
        %611 = vst [vmem:[%s242] sm:$0xff] %v595
        %612 = vst [vmem:[%s242 + $0x8] sm:$0xff] %v596
        %613 = vst [vmem:[%s242 + $0x10] sm:$0xff] %v597
        %614 = vst [vmem:[%s242 + $0x18] sm:$0xff] %v598
        %615 = vst [vmem:[%s242 + $0x20] sm:$0xff] %v599
        %616 = vst [vmem:[%s242 + $0x28] sm:$0xff] %v600
        %617 = vst [vmem:[%s242 + $0x30] sm:$0xff] %v601
        %618 = vst [vmem:[%s242 + $0x38] sm:$0xff] %v602
        %619 = vst [vmem:[%s242 + $0x40] sm:$0xff] %v603
        %620 = vst [vmem:[%s242 + $0x48] sm:$0xff] %v604
        %621 = vst [vmem:[%s242 + $0x50] sm:$0xff] %v605
        %622 = vst [vmem:[%s242 + $0x58] sm:$0xff] %v606
        %623 = vst [vmem:[%s242 + $0x60] sm:$0xff] %v607
        %624 = vst [vmem:[%s242 + $0x68] sm:$0xff] %v608
        %625 = vst [vmem:[%s242 + $0x70] sm:$0xff] %v609
        %626 = vst [vmem:[%s242 + $0x78] sm:$0xff] %v610
        %s627 = sand.u32 %s153, 1
        %s628 = scalar_lea.sflag [#allocation3], %s627
        %s629 = sand.u32 %s153, 1
        %s630 = smul.addr %s629, 128
        %s631 = scalar_lea.vmem [#allocation2], %s630
        // Predicated region
        $region41: #{tpu_custom_call.1} parent=39 // pred_check
          %p632 = pneg %p163
        $region42: #{tpu_custom_call.1} parent=39 // pred_check_branch
          %634 = sbr.rel (%p632) target = $region44
        $region43: #{tpu_custom_call.1} parent=39 // pred_region
          %s635 = smul.u32 2, %s24
          %637 = vsyncadd %s628, 0
          %s638 = smul.addr %s23, 16
          %s639 = sadd.s32 %s635, %s638
          %s640 = smul.addr %s639, 8
          %s641 = scalar_lea.hbm %s5, %s640
          %s642 = sshll.u32 %s631, 4
          %s643 = int_to_ptr.vmem [resolvable:$true] %s642
          %s644 = sshll.u32 %s641, 4
          %s645 = int_to_ptr.hbm [resolvable:$true] %s644
          %650 = dma.vmem_to_hbm [thread:$0]  %s643, 2048, %s645, %s628, 256, 256, 16
        $region44: #{tpu_custom_call.1} parent=39 // pred_fallthru
          _
      $region40: #{tpu_custom_call.1} parent=5 // pred_fallthru
        _
      %p651 = scmp.le.s32.totalorder 2, %s14
      // Predicated region
      $region45: #{tpu_custom_call.1} parent=5 // pred_check
        %p652 = pneg %p651
      $region46: #{tpu_custom_call.1} parent=5 // pred_check_branch
        %654 = sbr.rel (%p652) target = $region48
      $region47: #{tpu_custom_call.1} parent=5 // pred_region
        %s655 = ssub.s32 %s14, 2
        // Predicated region
        $region49: #{tpu_custom_call.1} parent=47 // pred_check
          %p656 = pneg %p169
        $region50: #{tpu_custom_call.1} parent=47 // pred_check_branch
          %658 = sbr.rel (%p656) target = $region52
        $region51: #{tpu_custom_call.1} parent=47 // pred_region
          %s659 = sand.u32 %s154, 1
          %s660 = scalar_lea.sflag [#allocation3], %s659
          %s661 = sand.u32 %s154, 1
          %s662 = smul.addr %s661, 128
          %s663 = scalar_lea.vmem [#allocation2], %s662
          %665 = dma.done %s660, 2048
        $region52: #{tpu_custom_call.1} parent=47 // pred_fallthru
          _
      $region48: #{tpu_custom_call.1} parent=5 // pred_fallthru
        _
    $region6: #{tpu_custom_call.1} parent=1 // loop_footer
      %s18 = sadd.s32 1, %s14
    $region7: #{tpu_custom_call.1} parent=1 // loop_footer_branch
      %13 = sbr.rel target = $region3
    $region8: #{tpu_custom_call.1} parent=1 // loop_exit
      _
    %666 = vsyncpa [#allocation3], 1
    %s667 = scalar_lea.sflag [#allocation3], 1
    %668 = vsyncpa %s667, 1

</llo_original>
